<compile_context>
chip_gen: v6e
topology: v6e:2x2x1
jax: 0.10.0
libtpu: 0.0.40
codegen_flags: <defaults>
</compile_context>

<pallas_src>
import jax
import jax.numpy as jnp
from jax import lax
from jax.experimental import pallas as pl
from jax.experimental.pallas import tpu as pltpu


# ----------------------------------------------------------------------------
# Plain-JAX glue: sampling / grouping.
# TODO(synk): farthest_point_sample / query_ball_point / index_points are
# data-dependent sort+gather ops with no clean Pallas TPU equivalent here; kept
# in plain JAX.  torch seeds FPS with randint -- we use deterministic index 0.
# ----------------------------------------------------------------------------

def farthest_point_sample(xyz, npoint):
    """xyz: [B, N, 3] -> sampled indices [B, npoint] int32."""
    B, N, _ = xyz.shape

    def body(i, state):
        centroids, distance, farthest = state
        centroids = centroids.at[:, i].set(farthest)
        centroid = jnp.take_along_axis(xyz, farthest[:, None, None], axis=1)  # [B,1,3]
        dist = jnp.sum((xyz - centroid) ** 2, axis=-1)                        # [B,N]
        distance = jnp.minimum(distance, dist)
        farthest = jnp.argmax(distance, axis=-1).astype(jnp.int32)
        return centroids, distance, farthest

    centroids = jnp.zeros((B, npoint), jnp.int32)
    distance = jnp.full((B, N), 1e10, jnp.float32)
    farthest = jnp.zeros((B,), jnp.int32)
    centroids, _, _ = lax.fori_loop(0, npoint, body, (centroids, distance, farthest))
    return centroids


def index_points(points, idx):
    """points: [B, N, C], idx: [B, ...] -> [B, ..., C]."""
    B = points.shape[0]
    batch = jnp.arange(B, dtype=jnp.int32).reshape((B,) + (1,) * (idx.ndim - 1))
    return points[batch, idx]


def square_distance(src, dst):
    """src: [B, N, C], dst: [B, M, C] -> squared distances [B, N, M]."""
    d = -2.0 * jnp.einsum("bnc,bmc->bnm", src, dst)
    d = d + jnp.sum(src ** 2, axis=-1)[:, :, None]
    d = d + jnp.sum(dst ** 2, axis=-1)[:, None, :]
    return d


def query_ball_point(radius, nsample, xyz, new_xyz):
    """xyz: [B, N, 3], new_xyz: [B, S, 3] -> group indices [B, S, nsample]."""
    B, N, _ = xyz.shape
    S = new_xyz.shape[1]
    sqrdists = square_distance(new_xyz, xyz)                            # [B,S,N]
    idx = jnp.broadcast_to(jnp.arange(N, dtype=jnp.int32), (B, S, N))
    idx = jnp.where(sqrdists > radius ** 2, N, idx)
    idx = jnp.sort(idx, axis=-1)[:, :, :nsample]
    first = idx[:, :, :1]
    return jnp.where(idx == N, first, idx)


def _group_features(xyz, points, new_xyz, radius, nsample):
    """Grouped per-neighbour features for one scale: [B, S, K, D+3]."""
    idx = query_ball_point(radius, nsample, xyz, new_xyz)               # [B,S,K]
    grouped_xyz = index_points(xyz, idx) - new_xyz[:, :, None, :]       # [B,S,K,3]
    if points is not None:
        grouped_pts = index_points(points, idx)                         # [B,S,K,D]
        return jnp.concatenate([grouped_pts, grouped_xyz], axis=-1)
    return grouped_xyz


# ----------------------------------------------------------------------------
# Pallas kernel: fused (1x1 conv + BN + ReLU) x L  +  max-pool over nsample.
# ----------------------------------------------------------------------------

def _round_up(x, m):
    return ((x + m - 1) // m) * m


def _fold_conv_bn(conv_w, conv_b, gamma, beta, mean, var, eps=1e-5):
    """Fold 1x1 Conv2d + inference-mode BatchNorm2d into (W [in,out], b [out])."""
    # TODO(synk): BatchNorm is folded with running statistics (inference mode);
    # training-mode batch statistics are not computed in-kernel.
    s = gamma / jnp.sqrt(var + eps)
    w_eff = (conv_w * s[:, None]).T           # [in, out]
    b_eff = s * (conv_b - mean) + beta        # [out]
    return w_eff, b_eff


def _make_mlp_pool_kernel(num_layers, tile_g, nsample):
    def kernel(*refs):
        x_ref = refs[0]
        out_ref = refs[1 + 2 * num_layers]
        h = x_ref[...]                                             # bf16 [tile_g*K, Cpad]
        for j in range(num_layers):
            w = refs[1 + 2 * j][...]                               # bf16 [Cpad, Cpad]
            b = refs[2 + 2 * j][...]                               # f32  [1, Cpad]
            h = jnp.dot(h, w, preferred_element_type=jnp.float32) + b
            h = jnp.maximum(h, 0.0)                                # bias/ReLU in f32
            if j + 1 < num_layers:
                h = h.astype(jnp.bfloat16)                         # bf16 MXU operands
        h = h.reshape(tile_g, nsample, h.shape[-1])
        out_ref[...] = jnp.max(h, axis=1)                          # max-pool over K
    return kernel


def _msg_scale_mlp_pallas(feat, folded_layers):
    """feat: [B, S, K, C_in] f32 -> [B, S, C_out] f32 (MLP stack + max over K)."""
    B, S, K, c_in = feat.shape
    dims = [c_in] + [w.shape[1] for w, _ in folded_layers]
    dims_pad = [_round_up(d, 128) for d in dims]                   # lane-dense channels
    c_out, c_out_pad = dims[-1], dims_pad[-1]

    # Pad + cast parameters once (weights bf16, biases f32, zero-padded cols).
    ws, bs = [], []
    for j, (w, b) in enumerate(folded_layers):
        wp = jnp.zeros((dims_pad[j], dims_pad[j + 1]), jnp.float32)
        wp = wp.at[: w.shape[0], : w.shape[1]].set(w)
        bp = jnp.zeros((1, dims_pad[j + 1]), jnp.float32).at[0, : b.shape[0]].set(b)
        ws.append(wp.astype(jnp.bfloat16))
        bs.append(bp)

    # Row tiling: tile_g centroid-groups of K neighbour rows per grid step
    # (>= 8 sublanes for the pooled output block, ~128+ rows to fill the MXU).
    G = B * S
    tile_g = max(8, _round_up(max(1, 128 // K), 8))
    G_pad = _round_up(G, tile_g)

    x = feat.reshape(G, K, c_in)
    x = jnp.pad(x, ((0, G_pad - G), (0, 0), (0, dims_pad[0] - c_in)))
    x = x.reshape(G_pad * K, dims_pad[0]).astype(jnp.bfloat16)

    num_layers = len(folded_layers)
    in_specs = [pl.BlockSpec((tile_g * K, dims_pad[0]), lambda g: (g, 0))]
    flat_params = []
    for wp, bp in zip(ws, bs):
        in_specs.append(pl.BlockSpec(wp.shape, lambda g: (0, 0)))   # VMEM-resident
        in_specs.append(pl.BlockSpec(bp.shape, lambda g: (0, 0)))
        flat_params += [wp, bp]

    out = pl.pallas_call(
        _make_mlp_pool_kernel(num_layers, tile_g, K),
        out_shape=jax.ShapeDtypeStruct((G_pad, c_out_pad), jnp.float32),
        grid=(G_pad // tile_g,),
        in_specs=in_specs,
        out_specs=pl.BlockSpec((tile_g, c_out_pad), lambda g: (g, 0)),
        compiler_params=pltpu.CompilerParams(
            dimension_semantics=("parallel",)),                     # megacore on v7x
    )(x, *flat_params)

    return out[:G, :c_out].reshape(B, S, c_out)


# ----------------------------------------------------------------------------
# Full module forward (Pallas-accelerated) + pure-JAX reference.
# ----------------------------------------------------------------------------

def pointnet_sa_msg_forward(xyz_bcn, points_bdn, params, npoint,
                            radius_list, nsample_list):
    """xyz_bcn: [B,3,N], points_bdn: [B,D,N] or None.

    Returns (new_xyz [B,3,S], new_points_concat [B, sum(mlp[-1]), S]).
    """
    xyz = jnp.transpose(xyz_bcn, (0, 2, 1))
    points = None if points_bdn is None else jnp.transpose(points_bdn, (0, 2, 1))
    new_xyz = index_points(xyz, farthest_point_sample(xyz, npoint))  # [B,S,3]

    outs = []
    for i, radius in enumerate(radius_list):
        feat = _group_features(xyz, points, new_xyz, radius, nsample_list[i])
        folded = [_fold_conv_bn(*lp) for lp in params[i]]
        outs.append(_msg_scale_mlp_pallas(feat, folded))             # [B,S,C_i]
    new_points = jnp.concatenate(outs, axis=-1)
    return jnp.transpose(new_xyz, (0, 2, 1)), jnp.transpose(new_points, (0, 2, 1))


def reference_forward(xyz_bcn, points_bdn, params, npoint, radius_list, nsample_list):
    """Pure-JAX f32 reference with identical sampling/grouping glue."""
    xyz = jnp.transpose(xyz_bcn, (0, 2, 1))
    points = None if points_bdn is None else jnp.transpose(points_bdn, (0, 2, 1))
    new_xyz = index_points(xyz, farthest_point_sample(xyz, npoint))
    outs = []
    for i, radius in enumerate(radius_list):
        h = _group_features(xyz, points, new_xyz, radius, nsample_list[i])
        for lp in params[i]:
            w, b = _fold_conv_bn(*lp)
            h = jnp.maximum(jnp.einsum("bskc,cd->bskd", h, w) + b, 0.0)
        outs.append(jnp.max(h, axis=2))
    new_points = jnp.concatenate(outs, axis=-1)
    return jnp.transpose(new_xyz, (0, 2, 1)), jnp.transpose(new_points, (0, 2, 1))


def make_msg_params(key, in_channel, mlp_list):
    """Per scale, per layer: (conv_w [out,in], conv_b, gamma, beta, mean, var)."""
    params = []
    for mlp in mlp_list:
        layers = []
        last = in_channel + 3
        for out_c in mlp:
            key, kw, kb, kg, kbeta, km, kv = jax.random.split(key, 7)
            bound = 1.0 / float(last) ** 0.5
            conv_w = jax.random.uniform(kw, (out_c, last), jnp.float32, -bound, bound)
            conv_b = jax.random.uniform(kb, (out_c,), jnp.float32, -bound, bound)
            gamma = jax.random.uniform(kg, (out_c,), jnp.float32, 0.5, 1.5)
            beta = 0.1 * jax.random.normal(kbeta, (out_c,), jnp.float32)
            mean = 0.1 * jax.random.normal(km, (out_c,), jnp.float32)
            var = jax.random.uniform(kv, (out_c,), jnp.float32, 0.5, 1.5)
            layers.append((conv_w, conv_b, gamma, beta, mean, var))
            last = out_c
        params.append(layers)
    return params


if __name__ == "__main__":
    B, N, D_FEAT = 2, 64, 4
    NPOINT = 16
    RADIUS_LIST = [0.4, 0.8]
    NSAMPLE_LIST = [16, 32]
    MLP_LIST = [[16, 16, 32], [32, 32, 64]]

    key = jax.random.PRNGKey(0)
    kx, kp, kparam = jax.random.split(key, 3)
    xyz = jax.random.uniform(kx, (B, 3, N), jnp.float32)            # positions in [0,1)^3
    points = jax.random.normal(kp, (B, D_FEAT, N), jnp.float32)     # per-point features
    params = make_msg_params(kparam, D_FEAT, MLP_LIST)

    new_xyz_p, new_points_p = pointnet_sa_msg_forward(
        xyz, points, params, NPOINT, RADIUS_LIST, NSAMPLE_LIST)
    new_xyz_p = jax.block_until_ready(new_xyz_p)
    new_points_p = jax.block_until_ready(new_points_p)

    new_xyz_r, new_points_r = reference_forward(
        xyz, points, params, NPOINT, RADIUS_LIST, NSAMPLE_LIST)

    assert new_xyz_p.shape == (B, 3, NPOINT), new_xyz_p.shape
    assert new_points_p.shape == (B, sum(m[-1] for m in MLP_LIST), NPOINT), new_points_p.shape
    assert jnp.allclose(new_xyz_p, new_xyz_r, atol=1e-5, rtol=1e-5)
    # bf16 matmul operands (f32 accumulation) -> loosened tolerance vs f32 reference.
    max_err = float(jnp.max(jnp.abs(new_points_p - new_points_r)))
    assert jnp.allclose(new_points_p, new_points_r, atol=5e-2, rtol=5e-2), max_err

    print("KERNEL_OK")
</pallas_src>

<mosaic_0001>
module attributes {stable_mosaic.version = 11 : i64} {
  func.func @kernel(%arg0: i32, %arg1: memref<128x128xbf16, #tpu.memory_space<vmem>>, %arg2: memref<128x128xbf16, #tpu.memory_space<vmem>>, %arg3: memref<1x128xf32, #tpu.memory_space<vmem>>, %arg4: memref<128x128xbf16, #tpu.memory_space<vmem>>, %arg5: memref<1x128xf32, #tpu.memory_space<vmem>>, %arg6: memref<128x128xbf16, #tpu.memory_space<vmem>>, %arg7: memref<1x128xf32, #tpu.memory_space<vmem>>, %arg8: memref<8x128xf32, #tpu.memory_space<vmem>>) attributes {dimension_semantics = [#tpu.dimension_semantics<parallel>], iteration_bounds = array<i64: 4>, scalar_prefetch = 0 : i64, scratch_operands = 0 : i64, tpu.core_type = #tpu.core_type<tc>, window_params = [{transform_indices = @transform_0, window_bounds = array<i64: 128, 128>}, {pipeline_mode = #tpu.pipeline_mode<synchronous>, transform_indices = @transform_1, window_bounds = array<i64: 128, 128>}, {pipeline_mode = #tpu.pipeline_mode<synchronous>, transform_indices = @transform_2, window_bounds = array<i64: 1, 128>}, {pipeline_mode = #tpu.pipeline_mode<synchronous>, transform_indices = @transform_3, window_bounds = array<i64: 128, 128>}, {pipeline_mode = #tpu.pipeline_mode<synchronous>, transform_indices = @transform_4, window_bounds = array<i64: 1, 128>}, {pipeline_mode = #tpu.pipeline_mode<synchronous>, transform_indices = @transform_5, window_bounds = array<i64: 128, 128>}, {pipeline_mode = #tpu.pipeline_mode<synchronous>, transform_indices = @transform_6, window_bounds = array<i64: 1, 128>}, {transform_indices = @transform_7, window_bounds = array<i64: 8, 128>}]} {
    %c0 = arith.constant 0 : index
    %c0_0 = arith.constant 0 : index
    %0 = vector.load %arg1[%c0, %c0_0] : memref<128x128xbf16, #tpu.memory_space<vmem>>, vector<128x128xbf16>
    %c0_1 = arith.constant 0 : index
    %c0_2 = arith.constant 0 : index
    %1 = vector.load %arg2[%c0_1, %c0_2] : memref<128x128xbf16, #tpu.memory_space<vmem>>, vector<128x128xbf16>
    %c0_3 = arith.constant 0 : index
    %c0_4 = arith.constant 0 : index
    %2 = vector.load %arg3[%c0_3, %c0_4] : memref<1x128xf32, #tpu.memory_space<vmem>>, vector<1x128xf32>
    %cst = arith.constant dense<0.000000e+00> : vector<128x128xf32>
    %3 = tpu.matmul %0, %1, %cst {dimension_numbers = #tpu.dot_dimension_numbers<[1], [0], [0], [1], [0, 0, 1, 1], [], []>} : vector<128x128xbf16>, vector<128x128xbf16>, vector<128x128xf32> -> vector<128x128xf32>
    %4 = vector.broadcast %2 : vector<1x128xf32> to vector<128x128xf32>
    %5 = arith.addf %3, %4 : vector<128x128xf32>
    %cst_5 = arith.constant 0.000000e+00 : f32
    %6 = vector.broadcast %cst_5 : f32 to vector<128x128xf32>
    %7 = arith.maximumf %5, %6 : vector<128x128xf32>
    %8 = arith.truncf %7 : vector<128x128xf32> to vector<128x128xbf16>
    %c0_6 = arith.constant 0 : index
    %c0_7 = arith.constant 0 : index
    %9 = vector.load %arg4[%c0_6, %c0_7] : memref<128x128xbf16, #tpu.memory_space<vmem>>, vector<128x128xbf16>
    %c0_8 = arith.constant 0 : index
    %c0_9 = arith.constant 0 : index
    %10 = vector.load %arg5[%c0_8, %c0_9] : memref<1x128xf32, #tpu.memory_space<vmem>>, vector<1x128xf32>
    %cst_10 = arith.constant dense<0.000000e+00> : vector<128x128xf32>
    %11 = tpu.matmul %8, %9, %cst_10 {dimension_numbers = #tpu.dot_dimension_numbers<[1], [0], [0], [1], [0, 0, 1, 1], [], []>} : vector<128x128xbf16>, vector<128x128xbf16>, vector<128x128xf32> -> vector<128x128xf32>
    %12 = vector.broadcast %10 : vector<1x128xf32> to vector<128x128xf32>
    %13 = arith.addf %11, %12 : vector<128x128xf32>
    %cst_11 = arith.constant 0.000000e+00 : f32
    %14 = vector.broadcast %cst_11 : f32 to vector<128x128xf32>
    %15 = arith.maximumf %13, %14 : vector<128x128xf32>
    %16 = arith.truncf %15 : vector<128x128xf32> to vector<128x128xbf16>
    %c0_12 = arith.constant 0 : index
    %c0_13 = arith.constant 0 : index
    %17 = vector.load %arg6[%c0_12, %c0_13] : memref<128x128xbf16, #tpu.memory_space<vmem>>, vector<128x128xbf16>
    %c0_14 = arith.constant 0 : index
    %c0_15 = arith.constant 0 : index
    %18 = vector.load %arg7[%c0_14, %c0_15] : memref<1x128xf32, #tpu.memory_space<vmem>>, vector<1x128xf32>
    %cst_16 = arith.constant dense<0.000000e+00> : vector<128x128xf32>
    %19 = tpu.matmul %16, %17, %cst_16 {dimension_numbers = #tpu.dot_dimension_numbers<[1], [0], [0], [1], [0, 0, 1, 1], [], []>} : vector<128x128xbf16>, vector<128x128xbf16>, vector<128x128xf32> -> vector<128x128xf32>
    %20 = vector.broadcast %18 : vector<1x128xf32> to vector<128x128xf32>
    %21 = arith.addf %19, %20 : vector<128x128xf32>
    %cst_17 = arith.constant 0.000000e+00 : f32
    %22 = vector.broadcast %cst_17 : f32 to vector<128x128xf32>
    %23 = arith.maximumf %21, %22 : vector<128x128xf32>
    %24 = vector.shape_cast %23 : vector<128x128xf32> to vector<8x16x128xf32>
    %cst_18 = arith.constant dense<0xFF800000> : vector<8x128xf32>
    %25 = vector.multi_reduction <maximumf>, %24, %cst_18 [1] : vector<8x16x128xf32> to vector<8x128xf32>
    %c0_19 = arith.constant 0 : index
    %c0_20 = arith.constant 0 : index
    %26 = vector.load %arg8[%c0_19, %c0_20] : memref<8x128xf32, #tpu.memory_space<vmem>>, vector<8x128xf32>
    tpu.vector_store %arg8[%c0_19, %c0_20], %25 {strides = array<i32>} : memref<8x128xf32, #tpu.memory_space<vmem>>, vector<8x128xf32>,
    return
  }
  func.func @transform_0(%arg0: i32) -> (i32, i32) {
    %c0_i32 = arith.constant 0 : i32
    %c0_i32_0 = arith.constant 0 : i32
    return %arg0, %c0_i32 : i32, i32
  }
  func.func @transform_1(%arg0: i32) -> (i32, i32) {
    %c0_i32 = arith.constant 0 : i32
    %c0_i32_0 = arith.constant 0 : i32
    %c0_i32_1 = arith.constant 0 : i32
    return %c0_i32, %c0_i32_0 : i32, i32
  }
  func.func @transform_2(%arg0: i32) -> (i32, i32) {
    %c0_i32 = arith.constant 0 : i32
    %c0_i32_0 = arith.constant 0 : i32
    %c0_i32_1 = arith.constant 0 : i32
    return %c0_i32, %c0_i32_0 : i32, i32
  }
  func.func @transform_3(%arg0: i32) -> (i32, i32) {
    %c0_i32 = arith.constant 0 : i32
    %c0_i32_0 = arith.constant 0 : i32
    %c0_i32_1 = arith.constant 0 : i32
    return %c0_i32, %c0_i32_0 : i32, i32
  }
  func.func @transform_4(%arg0: i32) -> (i32, i32) {
    %c0_i32 = arith.constant 0 : i32
    %c0_i32_0 = arith.constant 0 : i32
    %c0_i32_1 = arith.constant 0 : i32
    return %c0_i32, %c0_i32_0 : i32, i32
  }
  func.func @transform_5(%arg0: i32) -> (i32, i32) {
    %c0_i32 = arith.constant 0 : i32
    %c0_i32_0 = arith.constant 0 : i32
    %c0_i32_1 = arith.constant 0 : i32
    return %c0_i32, %c0_i32_0 : i32, i32
  }
  func.func @transform_6(%arg0: i32) -> (i32, i32) {
    %c0_i32 = arith.constant 0 : i32
    %c0_i32_0 = arith.constant 0 : i32
    %c0_i32_1 = arith.constant 0 : i32
    return %c0_i32, %c0_i32_0 : i32, i32
  }
  func.func @transform_7(%arg0: i32) -> (i32, i32) {
    %c0_i32 = arith.constant 0 : i32
    %c0_i32_0 = arith.constant 0 : i32
    return %arg0, %c0_i32 : i32, i32
  }
}

</mosaic_0001>

<llo_original>
// kernel: tpu_custom_call.1
$region0: #{tpu_custom_call.1}
  #allocation0 [shape = 'u32[]', space=smem, size = 0x4, offset = 0x4, fixed_abs, tag = 'smem constant byte address 0x4 - core index']
  #allocation1 [shape = 'u32[144,128]{1,0:T(1,128)}', space=vmem, size = 0x12000, scoped, tag = 'internal scratch']
  %s0 = inlined_call_operand.hbm [shape: bf16[512,128], index: 0, kind: input, shape index: {}]
  %s1 = inlined_call_operand.hbm [shape: bf16[128,128], index: 1, kind: input, shape index: {}]
  %s2 = inlined_call_operand.vmem [shape: f32[1,128], index: 2, kind: input, shape index: {}]
  %s3 = inlined_call_operand.hbm [shape: bf16[128,128], index: 3, kind: input, shape index: {}]
  %s4 = inlined_call_operand.vmem [shape: f32[1,128], index: 4, kind: input, shape index: {}]
  %s5 = inlined_call_operand.hbm [shape: bf16[128,128], index: 5, kind: input, shape index: {}]
  %s6 = inlined_call_operand.vmem [shape: f32[1,128], index: 6, kind: input, shape index: {}]
  %s7 = inlined_call_operand.hbm [shape: f32[32,128], index: 7, kind: output, shape index: {}]
  %s8 = sld [smem:[#allocation0]]
  $region77: #{tpu_custom_call.1} parent=0
    _
  %s10 = ssub.s32 1, %s8
  %s11 = scalar_select 0, %s10, %s8
  $region1: #{tpu_custom_call.1} parent=0
    #allocation2 [shape = 'u8[65536]{0}', space=vmem, size = 0x10000, scoped, tag = 'input window, operand 0']
    #allocation3 [shape = 's32[2]{0}', space=sflag, size = 0x8, scoped, tag = 'scoped memory for tpu_custom_call.1']
    #allocation4 [shape = 's32[2]{0}', space=sflag, size = 0x8, scoped, tag = 'scoped memory for tpu_custom_call.1']
    #allocation5 [shape = 'u8[32768]{0}', space=vmem, size = 0x8000, scoped, tag = 'input window, operand 1, single buffered']
    #allocation6 [shape = 's32[1]{0}', space=sflag, size = 0x4, scoped, tag = 'scoped memory for tpu_custom_call.1']
    #allocation7 [shape = 'u8[32768]{0}', space=vmem, size = 0x8000, scoped, tag = 'input window, operand 3, single buffered']
    #allocation8 [shape = 'u8[32768]{0}', space=vmem, size = 0x8000, scoped, tag = 'input window, operand 5, single buffered']
    #allocation9 [shape = 's32[1]{0}', space=sflag, size = 0x4, scoped, tag = 'scoped memory for tpu_custom_call.1']
    #allocation10 [shape = 'u8[8192]{0}', space=vmem, size = 0x2000, scoped, tag = 'output window, operand 0']
    %12 = vsyncpa [#allocation3], 0
    %s13 = scalar_lea.sflag [#allocation3], 1
    %14 = vsyncpa %s13, 0
    %15 = vsyncpa [#allocation6], 0
    %16 = vsyncpa [#allocation9], 0
    %17 = vsyncpa [#allocation4], 0
    %s18 = scalar_lea.sflag [#allocation4], 1
    %19 = vsyncpa %s18, 0
    loop: start=0, step=1, limit=6
    $region2: #{tpu_custom_call.1} parent=1 // loop_pre_header
      _
    $region3: #{tpu_custom_call.1} parent=1 // loop_header
      %s21 = sphi 0, %s25
      %p22 = scmp.ge.s32.totalorder %s21, 6
      %s31 = sphi 0, %s33
      %s34 = sphi 0, %s31
      %s35 = sphi 0, %s34
      %s51 = sphi 0, %s35
      %s55 = sphi 0, %s55
      %s57 = sphi 0, %s55
      %s58 = sphi 0, %s57
      %s72 = sphi 0, %s58
      %s76 = sphi 0, %s76
      %s78 = sphi 0, %s76
      %s79 = sphi 0, %s78
      %s93 = sphi 0, %s79
      %s97 = sphi 0, %s97
      %s99 = sphi 0, %s97
      %s100 = sphi 0, %s99
      %s114 = sphi 0, %s100
      %s118 = sphi 0, %s118
      %s120 = sphi 0, %s118
      %s121 = sphi 0, %s120
      %s135 = sphi 0, %s121
      %s139 = sphi 0, %s139
      %s141 = sphi 0, %s139
      %s142 = sphi 0, %s141
      %s156 = sphi 0, %s142
      %s160 = sphi 0, %s160
      %s162 = sphi 0, %s160
      %s163 = sphi 0, %s162
      %s177 = sphi 0, %s163
      %s183 = sphi 0, %s185
      %s186 = sphi 0, %s183
      %s187 = sphi 0, %s186
      %s203 = sphi 0, %s187
    $region4: #{tpu_custom_call.1} parent=1 // loop_header_branch
      %24 = sbr.rel (%p22) target = $region8
    $region5: #{tpu_custom_call.1} parent=1 // loop_body
      %s26 = ssub.s32 %s21, 1
      %s27 = ssub.s32 %s21, 2
      %s28 = sadd.s32 %s21, 1
      %s29 = ssub.s32 %s21, %s28
      %p30 = scmp.eq.s32.totalorder %s29, 0
      %s32 = sadd.s32 %s31, 1
      %s33 = scalar_select %p30, %s31, %s32
      %p36 = pneg %p30
      %p37 = scmp.eq.s32.totalorder %s21, 3
      %p38 = por %p36, %p37
      %p39 = scmp.ne.s32.totalorder %s31, %s34
      %p40 = scmp.eq.s32.totalorder %s21, 0
      %p41 = por %p39, %p40
      %p42 = scmp.ne.s32.totalorder %s31, %s34
      %p43 = scmp.eq.s32.totalorder %s26, 3
      %p44 = por %p42, %p43
      %p45 = scmp.ne.s32.totalorder %s34, %s35
      %p46 = scmp.eq.s32.totalorder %s26, 0
      %p47 = por %p45, %p46
      %p48 = scmp.ne.s32.totalorder %s34, %s35
      %p49 = scmp.eq.s32.totalorder %s27, 3
      %p50 = por %p48, %p49
      %p52 = scmp.ne.s32.totalorder %s35, %s51
      %p53 = scmp.eq.s32.totalorder %s27, 0
      %p54 = por %p52, %p53
      %s56 = sadd.s32 %s55, 1
      %p59 = scmp.eq.s32.totalorder %s21, 3
      %p60 = scmp.ne.s32.totalorder %s55, %s57
      %p61 = scmp.eq.s32.totalorder %s21, 0
      %p62 = por %p60, %p61
      %p63 = scmp.ne.s32.totalorder %s55, %s57
      %p64 = scmp.eq.s32.totalorder %s26, 3
      %p65 = por %p63, %p64
      %p66 = scmp.ne.s32.totalorder %s57, %s58
      %p67 = scmp.eq.s32.totalorder %s26, 0
      %p68 = por %p66, %p67
      %p69 = scmp.ne.s32.totalorder %s57, %s58
      %p70 = scmp.eq.s32.totalorder %s27, 3
      %p71 = por %p69, %p70
      %p73 = scmp.ne.s32.totalorder %s58, %s72
      %p74 = scmp.eq.s32.totalorder %s27, 0
      %p75 = por %p73, %p74
      %s77 = sadd.s32 %s76, 1
      %p80 = scmp.eq.s32.totalorder %s21, 3
      %p81 = scmp.ne.s32.totalorder %s76, %s78
      %p82 = scmp.eq.s32.totalorder %s21, 0
      %p83 = por %p81, %p82
      %p84 = scmp.ne.s32.totalorder %s76, %s78
      %p85 = scmp.eq.s32.totalorder %s26, 3
      %p86 = por %p84, %p85
      %p87 = scmp.ne.s32.totalorder %s78, %s79
      %p88 = scmp.eq.s32.totalorder %s26, 0
      %p89 = por %p87, %p88
      %p90 = scmp.ne.s32.totalorder %s78, %s79
      %p91 = scmp.eq.s32.totalorder %s27, 3
      %p92 = por %p90, %p91
      %p94 = scmp.ne.s32.totalorder %s79, %s93
      %p95 = scmp.eq.s32.totalorder %s27, 0
      %p96 = por %p94, %p95
      %s98 = sadd.s32 %s97, 1
      %p101 = scmp.eq.s32.totalorder %s21, 3
      %p102 = scmp.ne.s32.totalorder %s97, %s99
      %p103 = scmp.eq.s32.totalorder %s21, 0
      %p104 = por %p102, %p103
      %p105 = scmp.ne.s32.totalorder %s97, %s99
      %p106 = scmp.eq.s32.totalorder %s26, 3
      %p107 = por %p105, %p106
      %p108 = scmp.ne.s32.totalorder %s99, %s100
      %p109 = scmp.eq.s32.totalorder %s26, 0
      %p110 = por %p108, %p109
      %p111 = scmp.ne.s32.totalorder %s99, %s100
      %p112 = scmp.eq.s32.totalorder %s27, 3
      %p113 = por %p111, %p112
      %p115 = scmp.ne.s32.totalorder %s100, %s114
      %p116 = scmp.eq.s32.totalorder %s27, 0
      %p117 = por %p115, %p116
      %s119 = sadd.s32 %s118, 1
      %p122 = scmp.eq.s32.totalorder %s21, 3
      %p123 = scmp.ne.s32.totalorder %s118, %s120
      %p124 = scmp.eq.s32.totalorder %s21, 0
      %p125 = por %p123, %p124
      %p126 = scmp.ne.s32.totalorder %s118, %s120
      %p127 = scmp.eq.s32.totalorder %s26, 3
      %p128 = por %p126, %p127
      %p129 = scmp.ne.s32.totalorder %s120, %s121
      %p130 = scmp.eq.s32.totalorder %s26, 0
      %p131 = por %p129, %p130
      %p132 = scmp.ne.s32.totalorder %s120, %s121
      %p133 = scmp.eq.s32.totalorder %s27, 3
      %p134 = por %p132, %p133
      %p136 = scmp.ne.s32.totalorder %s121, %s135
      %p137 = scmp.eq.s32.totalorder %s27, 0
      %p138 = por %p136, %p137
      %s140 = sadd.s32 %s139, 1
      %p143 = scmp.eq.s32.totalorder %s21, 3
      %p144 = scmp.ne.s32.totalorder %s139, %s141
      %p145 = scmp.eq.s32.totalorder %s21, 0
      %p146 = por %p144, %p145
      %p147 = scmp.ne.s32.totalorder %s139, %s141
      %p148 = scmp.eq.s32.totalorder %s26, 3
      %p149 = por %p147, %p148
      %p150 = scmp.ne.s32.totalorder %s141, %s142
      %p151 = scmp.eq.s32.totalorder %s26, 0
      %p152 = por %p150, %p151
      %p153 = scmp.ne.s32.totalorder %s141, %s142
      %p154 = scmp.eq.s32.totalorder %s27, 3
      %p155 = por %p153, %p154
      %p157 = scmp.ne.s32.totalorder %s142, %s156
      %p158 = scmp.eq.s32.totalorder %s27, 0
      %p159 = por %p157, %p158
      %s161 = sadd.s32 %s160, 1
      %p164 = scmp.eq.s32.totalorder %s21, 3
      %p165 = scmp.ne.s32.totalorder %s160, %s162
      %p166 = scmp.eq.s32.totalorder %s21, 0
      %p167 = por %p165, %p166
      %p168 = scmp.ne.s32.totalorder %s160, %s162
      %p169 = scmp.eq.s32.totalorder %s26, 3
      %p170 = por %p168, %p169
      %p171 = scmp.ne.s32.totalorder %s162, %s163
      %p172 = scmp.eq.s32.totalorder %s26, 0
      %p173 = por %p171, %p172
      %p174 = scmp.ne.s32.totalorder %s162, %s163
      %p175 = scmp.eq.s32.totalorder %s27, 3
      %p176 = por %p174, %p175
      %p178 = scmp.ne.s32.totalorder %s163, %s177
      %p179 = scmp.eq.s32.totalorder %s27, 0
      %p180 = por %p178, %p179
      %s181 = ssub.s32 %s21, %s28
      %p182 = scmp.eq.s32.totalorder %s181, 0
      %s184 = sadd.s32 %s183, 1
      %s185 = scalar_select %p182, %s183, %s184
      %p188 = pneg %p182
      %p189 = scmp.eq.s32.totalorder %s21, 3
      %p190 = por %p188, %p189
      %p191 = scmp.ne.s32.totalorder %s183, %s186
      %p192 = scmp.eq.s32.totalorder %s21, 0
      %p193 = por %p191, %p192
      %p194 = scmp.ne.s32.totalorder %s183, %s186
      %p195 = scmp.eq.s32.totalorder %s26, 3
      %p196 = por %p194, %p195
      %p197 = scmp.ne.s32.totalorder %s186, %s187
      %p198 = scmp.eq.s32.totalorder %s26, 0
      %p199 = por %p197, %p198
      %p200 = scmp.ne.s32.totalorder %s186, %s187
      %p201 = scmp.eq.s32.totalorder %s27, 3
      %p202 = por %p200, %p201
      %p204 = scmp.ne.s32.totalorder %s187, %s203
      %p205 = scmp.eq.s32.totalorder %s27, 0
      %p206 = por %p204, %p205
      %p207 = scmp.le.s32.totalorder 1, %s21
      %p208 = scmp.lt.s32.totalorder %s21, 5
      %p209 = pnand %p207, %p208
      %p210 = pneg %p209
      // Predicated region
      $region9: #{tpu_custom_call.1} parent=5 // pred_check
        _
      $region10: #{tpu_custom_call.1} parent=5 // pred_check_branch
        %212 = sbr.rel (%p209) target = $region12
      $region11: #{tpu_custom_call.1} parent=5 // pred_region
        %s213 = ssub.s32 %s21, 1
        // Predicated region
        $region13: #{tpu_custom_call.1} parent=11 // pred_check
          %p214 = pneg %p68
        $region14: #{tpu_custom_call.1} parent=11 // pred_check_branch
          %216 = sbr.rel (%p214) target = $region16
        $region15: #{tpu_custom_call.1} parent=11 // pred_region
          %s218 = ssub.s32 1024, 1024
          %219 = vsyncadd [#allocation6], %s218
          %s220 = sshll.u32 [#allocation5], 4
          %s221 = int_to_ptr.vmem [resolvable:$true] %s220
          %226 = dma.hbm_to_vmem [thread:$0]  %s1, 1024, %s221, [#allocation6], 64, 64, 4
        $region16: #{tpu_custom_call.1} parent=11 // pred_fallthru
          _
        // Predicated region
        $region17: #{tpu_custom_call.1} parent=11 // pred_check
          %p227 = pneg %p89
        $region18: #{tpu_custom_call.1} parent=11 // pred_check_branch
          %229 = sbr.rel (%p227) target = $region20
        $region19: #{tpu_custom_call.1} parent=11 // pred_region
          _
        $region20: #{tpu_custom_call.1} parent=11 // pred_fallthru
          _
        // Predicated region
        $region21: #{tpu_custom_call.1} parent=11 // pred_check
          %p230 = pneg %p110
        $region22: #{tpu_custom_call.1} parent=11 // pred_check_branch
          %232 = sbr.rel (%p230) target = $region24
        $region23: #{tpu_custom_call.1} parent=11 // pred_region
          %s234 = ssub.s32 1024, 1024
          %235 = vsyncadd [#allocation6], %s234
          %s236 = sshll.u32 [#allocation7], 4
          %s237 = int_to_ptr.vmem [resolvable:$true] %s236
          %242 = dma.hbm_to_vmem [thread:$0]  %s3, 1024, %s237, [#allocation6], 64, 64, 4
        $region24: #{tpu_custom_call.1} parent=11 // pred_fallthru
          _
        // Predicated region
        $region25: #{tpu_custom_call.1} parent=11 // pred_check
          %p243 = pneg %p131
        $region26: #{tpu_custom_call.1} parent=11 // pred_check_branch
          %245 = sbr.rel (%p243) target = $region28
        $region27: #{tpu_custom_call.1} parent=11 // pred_region
          _
        $region28: #{tpu_custom_call.1} parent=11 // pred_fallthru
          _
        // Predicated region
        $region29: #{tpu_custom_call.1} parent=11 // pred_check
          %p246 = pneg %p152
        $region30: #{tpu_custom_call.1} parent=11 // pred_check_branch
          %248 = sbr.rel (%p246) target = $region32
        $region31: #{tpu_custom_call.1} parent=11 // pred_region
          %s250 = ssub.s32 1024, 1024
          %251 = vsyncadd [#allocation9], %s250
          %s252 = sshll.u32 [#allocation8], 4
          %s253 = int_to_ptr.vmem [resolvable:$true] %s252
          %258 = dma.hbm_to_vmem [thread:$0]  %s5, 1024, %s253, [#allocation9], 64, 64, 4
        $region32: #{tpu_custom_call.1} parent=11 // pred_fallthru
          _
        // Predicated region
        $region33: #{tpu_custom_call.1} parent=11 // pred_check
          %p259 = pneg %p173
        $region34: #{tpu_custom_call.1} parent=11 // pred_check_branch
          %261 = sbr.rel (%p259) target = $region36
        $region35: #{tpu_custom_call.1} parent=11 // pred_region
          _
        $region36: #{tpu_custom_call.1} parent=11 // pred_fallthru
          _
      $region12: #{tpu_custom_call.1} parent=5 // pred_fallthru
        _
      %p262 = scmp.lt.s32.totalorder %s21, 4
      // Predicated region
      $region37: #{tpu_custom_call.1} parent=5 // pred_check
        %p263 = pneg %p262
      $region38: #{tpu_custom_call.1} parent=5 // pred_check_branch
        %265 = sbr.rel (%p263) target = $region40
      $region39: #{tpu_custom_call.1} parent=5 // pred_region
        // Predicated region
        $region41: #{tpu_custom_call.1} parent=39 // pred_check
          %p266 = pneg %p41
        $region42: #{tpu_custom_call.1} parent=39 // pred_check_branch
          %268 = sbr.rel (%p266) target = $region44
        $region43: #{tpu_custom_call.1} parent=39 // pred_region
          %s269 = sand.u32 %s31, 1
          %s270 = scalar_lea.sflag [#allocation3], %s269
          %s271 = sand.u32 %s31, 1
          %s272 = smul.addr %s271, 64
          %s273 = scalar_lea.vmem [#allocation2], %s272
          %s274 = smul.u32 16, %s21
          %s276 = ssub.s32 1024, 1024
          %277 = vsyncadd %s270, %s276
          %s278 = smul.addr %s274, 64
          %s279 = scalar_lea.hbm %s0, %s278
          %s280 = sshll.u32 %s273, 4
          %s281 = int_to_ptr.vmem [resolvable:$true] %s280
          %286 = dma.hbm_to_vmem [thread:$0]  %s279, 1024, %s281, %s270, 64, 64, 4
        $region44: #{tpu_custom_call.1} parent=39 // pred_fallthru
          _
      $region40: #{tpu_custom_call.1} parent=5 // pred_fallthru
        _
      %p287 = scmp.le.s32.totalorder 1, %s21
      %p288 = scmp.lt.s32.totalorder %s21, 5
      %p289 = pnand %p287, %p288
      %p290 = pneg %p289
      // Predicated region
      $region45: #{tpu_custom_call.1} parent=5 // pred_check
        _
      $region46: #{tpu_custom_call.1} parent=5 // pred_check_branch
        %292 = sbr.rel (%p289) target = $region48
      $region47: #{tpu_custom_call.1} parent=5 // pred_region
        %s293 = ssub.s32 %s21, 1
        %s294 = sand.u32 %s34, 1
        %s295 = scalar_lea.sflag [#allocation3], %s294
        %s296 = sand.u32 %s34, 1
        %s297 = smul.addr %s296, 64
        %s298 = scalar_lea.vmem [#allocation2], %s297
        // Predicated region
        $region49: #{tpu_custom_call.1} parent=47 // pred_check
          %p299 = pneg %p47
        $region50: #{tpu_custom_call.1} parent=47 // pred_check_branch
          %301 = sbr.rel (%p299) target = $region52
        $region51: #{tpu_custom_call.1} parent=47 // pred_region
          %302 = dma.done %s295, 1024
        $region52: #{tpu_custom_call.1} parent=47 // pred_fallthru
          _
        // Predicated region
        $region53: #{tpu_custom_call.1} parent=47 // pred_check
          %p303 = pneg %p68
        $region54: #{tpu_custom_call.1} parent=47 // pred_check_branch
          %305 = sbr.rel (%p303) target = $region56
        $region55: #{tpu_custom_call.1} parent=47 // pred_region
          %306 = dma.done [#allocation6], 1024
        $region56: #{tpu_custom_call.1} parent=47 // pred_fallthru
          _
        // Predicated region
        $region57: #{tpu_custom_call.1} parent=47 // pred_check
          %p307 = pneg %p110
        $region58: #{tpu_custom_call.1} parent=47 // pred_check_branch
          %309 = sbr.rel (%p307) target = $region60
        $region59: #{tpu_custom_call.1} parent=47 // pred_region
          %310 = dma.done [#allocation6], 1024
        $region60: #{tpu_custom_call.1} parent=47 // pred_fallthru
          _
        // Predicated region
        $region61: #{tpu_custom_call.1} parent=47 // pred_check
          %p311 = pneg %p152
        $region62: #{tpu_custom_call.1} parent=47 // pred_check_branch
          %313 = sbr.rel (%p311) target = $region64
        $region63: #{tpu_custom_call.1} parent=47 // pred_region
          %314 = dma.done [#allocation9], 1024
        $region64: #{tpu_custom_call.1} parent=47 // pred_fallthru
          _
        %s315 = sand.u32 %s34, 1
        %s316 = scalar_lea.sflag [#allocation3], %s315
        %s317 = sand.u32 %s34, 1
        %s318 = smul.addr %s317, 64
        %s319 = scalar_lea.vmem [#allocation2], %s318
        %p320 = pneg %p47
        %p321 = pneg %p44
        %p322 = pneg %p68
        %p323 = pneg %p65
        %p324 = pneg %p89
        %p325 = pneg %p86
        %p326 = pneg %p110
        %p327 = pneg %p107
        %p328 = pneg %p131
        %p329 = pneg %p128
        %p330 = pneg %p152
        %p331 = pneg %p149
        %p332 = pneg %p173
        %p333 = pneg %p170
        %p334 = pneg %p199
        %p335 = pneg %p196
        %s336 = sand.u32 %s186, 1
        %s337 = scalar_lea.sflag [#allocation4], %s336
        %s338 = sand.u32 %s186, 1
        %s339 = smul.addr %s338, 8
        %s340 = scalar_lea.vmem [#allocation10], %s339
        %s341 = smul.u32 16, %s26
        %v343 = vld [vmem:[%s298] sm:$0xf]
        %v344 = vld [vmem:[%s298 + $0x4] sm:$0xf]
        %v345 = vld [vmem:[%s298 + $0x8] sm:$0xf]
        %v346 = vld [vmem:[%s298 + $0xc] sm:$0xf]
        %v347 = vld [vmem:[%s298 + $0x10] sm:$0xf]
        %v348 = vld [vmem:[%s298 + $0x14] sm:$0xf]
        %v349 = vld [vmem:[%s298 + $0x18] sm:$0xf]
        %v350 = vld [vmem:[%s298 + $0x1c] sm:$0xf]
        %v351 = vld [vmem:[%s298 + $0x20] sm:$0xf]
        %v352 = vld [vmem:[%s298 + $0x24] sm:$0xf]
        %v353 = vld [vmem:[%s298 + $0x28] sm:$0xf]
        %v354 = vld [vmem:[%s298 + $0x2c] sm:$0xf]
        %v355 = vld [vmem:[%s298 + $0x30] sm:$0xf]
        %v356 = vld [vmem:[%s298 + $0x34] sm:$0xf]
        %v357 = vld [vmem:[%s298 + $0x38] sm:$0xf]
        %v358 = vld [vmem:[%s298 + $0x3c] sm:$0xf]
        %v359 = vld [vmem:[#allocation5] sm:$0xf]
        %v360 = vld [vmem:[#allocation5 + $0x4] sm:$0xf]
        %v361 = vld [vmem:[#allocation5 + $0x8] sm:$0xf]
        %v362 = vld [vmem:[#allocation5 + $0xc] sm:$0xf]
        %v363 = vld [vmem:[#allocation5 + $0x10] sm:$0xf]
        %v364 = vld [vmem:[#allocation5 + $0x14] sm:$0xf]
        %v365 = vld [vmem:[#allocation5 + $0x18] sm:$0xf]
        %v366 = vld [vmem:[#allocation5 + $0x1c] sm:$0xf]
        %v367 = vld [vmem:[#allocation5 + $0x20] sm:$0xf]
        %v368 = vld [vmem:[#allocation5 + $0x24] sm:$0xf]
        %v369 = vld [vmem:[#allocation5 + $0x28] sm:$0xf]
        %v370 = vld [vmem:[#allocation5 + $0x2c] sm:$0xf]
        %v371 = vld [vmem:[#allocation5 + $0x30] sm:$0xf]
        %v372 = vld [vmem:[#allocation5 + $0x34] sm:$0xf]
        %v373 = vld [vmem:[#allocation5 + $0x38] sm:$0xf]
        %v374 = vld [vmem:[#allocation5 + $0x3c] sm:$0xf]
        %v375 = vld [vmem:[%s2] sm:$0x1]
        %v377 = vlaneseq
        %v378 = vshrl.u32 %v377, 7
        %v379 = vsub.s32 0, %v378
        %v380 = vrot.slane %v375, %v379
        %v398 = vunpack.c.l.b16 %v343
        %v399 = vunpack.c.l.b16 %v344
        %v400 = vunpack.c.l.b16 %v345
        %v401 = vunpack.c.l.b16 %v346
        %v402 = vunpack.c.l.b16 %v347
        %v403 = vunpack.c.l.b16 %v348
        %v404 = vunpack.c.l.b16 %v349
        %v405 = vunpack.c.l.b16 %v350
        %v406 = vunpack.c.l.b16 %v351
        %v407 = vunpack.c.l.b16 %v352
        %v408 = vunpack.c.l.b16 %v353
        %v409 = vunpack.c.l.b16 %v354
        %v410 = vunpack.c.l.b16 %v355
        %v411 = vunpack.c.l.b16 %v356
        %v412 = vunpack.c.l.b16 %v357
        %v413 = vunpack.c.l.b16 %v358
        %v414 = vpack.c.b16 %v399, %v398
        %v415 = vpack.c.b16 %v401, %v400
        %v416 = vpack.c.b16 %v403, %v402
        %v417 = vpack.c.b16 %v405, %v404
        %v418 = vpack.c.b16 %v407, %v406
        %v419 = vpack.c.b16 %v409, %v408
        %v420 = vpack.c.b16 %v411, %v410
        %v421 = vpack.c.b16 %v413, %v412
        %v446 = vunpack.c.l.b16 %v359
        %v447 = vunpack.c.l.b16 %v360
        %v448 = vunpack.c.l.b16 %v361
        %v449 = vunpack.c.l.b16 %v362
        %v450 = vunpack.c.l.b16 %v363
        %v451 = vunpack.c.l.b16 %v364
        %v452 = vunpack.c.l.b16 %v365
        %v453 = vunpack.c.l.b16 %v366
        %v454 = vunpack.c.l.b16 %v367
        %v455 = vunpack.c.l.b16 %v368
        %v456 = vunpack.c.l.b16 %v369
        %v457 = vunpack.c.l.b16 %v370
        %v458 = vunpack.c.l.b16 %v371
        %v459 = vunpack.c.l.b16 %v372
        %v460 = vunpack.c.l.b16 %v373
        %v461 = vunpack.c.l.b16 %v374
        %v462 = vpack.c.b16 %v447, %v446
        %v463 = vpack.c.b16 %v449, %v448
        %v464 = vpack.c.b16 %v451, %v450
        %v465 = vpack.c.b16 %v453, %v452
        %v466 = vpack.c.b16 %v455, %v454
        %v467 = vpack.c.b16 %v457, %v456
        %v468 = vpack.c.b16 %v459, %v458
        %v469 = vpack.c.b16 %v461, %v460
        %478 = vmatprep.subr.bf16.mxu0 0
        %479 = vmatpush1.bf16.msra.mxu0 %v469
        %480 = vmatprep.subr.bf16.mxu0 0
        %481 = vmatpush1.bf16.msra.mxu0 %v468
        %482 = vmatprep.subr.bf16.mxu0 0
        %483 = vmatpush1.bf16.msra.mxu0 %v467
        %484 = vmatprep.subr.bf16.mxu0 0
        %485 = vmatpush1.bf16.msra.mxu0 %v466
        %486 = vmatprep.subr.bf16.mxu0 0
        %487 = vmatpush1.bf16.msra.mxu0 %v465
        %488 = vmatprep.subr.bf16.mxu0 0
        %489 = vmatpush1.bf16.msra.mxu0 %v464
        %490 = vmatprep.subr.bf16.mxu0 0
        %491 = vmatpush1.bf16.msra.mxu0 %v463
        %492 = vmatprep.subr.bf16.mxu0 0
        %493 = vmatpush1.bf16.msra.mxu0 %v462
        %494 = vmatprep.subr.bf16.mxu0 0
        %495 = vmatpush2.bf16.msra.mxu0 0
        %496 = vmatprep.subr.bf16.mxu0 0
        %497 = vmatpush2.bf16.msra.mxu0 0
        %498 = vmatprep.subr.bf16.mxu0 0
        %499 = vmatpush2.bf16.msra.mxu0 0
        %500 = vmatprep.subr.bf16.mxu0 0
        %501 = vmatpush2.bf16.msra.mxu0 0
        %502 = vmatprep.subr.bf16.mxu0 0
        %503 = vmatpush2.bf16.msra.mxu0 0
        %504 = vmatprep.subr.bf16.mxu0 0
        %505 = vmatpush2.bf16.msra.mxu0 0
        %506 = vmatprep.subr.bf16.mxu0 0
        %507 = vmatpush2.bf16.msra.mxu0 0
        %508 = vmatprep.subr.bf16.mxu0 0
        %509 = vmatpush2.bf16.msra.mxu0 0
        %510 = vmatprep.mubr.bf16.mxu0 0
        %511 = vmatmul.mubr.bf16.gmra.mxu0 %v414
        %v512 = vpop.f32.mrf.mxu0
        %v513 = vadd.f32 %v380, %v512
        %v514 = vpop.f32.mrf.mxu0
        %v515 = vpop.f32.mrf.mxu0
        %v516 = vadd.f32 %v380, %v515
        %v517 = vpop.f32.mrf.mxu0
        %518 = vmatprep.mubr.bf16.mxu0 0
        %519 = vmatmul.mubr.bf16.gmra.mxu0 %v415
        %v520 = vpop.f32.mrf.mxu0
        %v521 = vadd.f32 %v380, %v520
        %v522 = vpop.f32.mrf.mxu0
        %v523 = vpop.f32.mrf.mxu0
        %v524 = vadd.f32 %v380, %v523
        %v525 = vpop.f32.mrf.mxu0
        %526 = vmatprep.mubr.bf16.mxu0 0
        %527 = vmatmul.mubr.bf16.gmra.mxu0 %v416
        %v528 = vpop.f32.mrf.mxu0
        %v529 = vadd.f32 %v380, %v528
        %v530 = vpop.f32.mrf.mxu0
        %v531 = vpop.f32.mrf.mxu0
        %v532 = vadd.f32 %v380, %v531
        %v533 = vpop.f32.mrf.mxu0
        %534 = vmatprep.mubr.bf16.mxu0 0
        %535 = vmatmul.mubr.bf16.gmra.mxu0 %v417
        %v536 = vpop.f32.mrf.mxu0
        %v537 = vadd.f32 %v380, %v536
        %v538 = vpop.f32.mrf.mxu0
        %v539 = vpop.f32.mrf.mxu0
        %v540 = vadd.f32 %v380, %v539
        %v541 = vpop.f32.mrf.mxu0
        %542 = vmatprep.mubr.bf16.mxu0 0
        %543 = vmatmul.mubr.bf16.gmra.mxu0 %v418
        %v544 = vpop.f32.mrf.mxu0
        %v545 = vadd.f32 %v380, %v544
        %v546 = vpop.f32.mrf.mxu0
        %v547 = vpop.f32.mrf.mxu0
        %v548 = vadd.f32 %v380, %v547
        %v549 = vpop.f32.mrf.mxu0
        %550 = vmatprep.mubr.bf16.mxu0 0
        %551 = vmatmul.mubr.bf16.gmra.mxu0 %v419
        %v552 = vpop.f32.mrf.mxu0
        %v553 = vadd.f32 %v380, %v552
        %v554 = vpop.f32.mrf.mxu0
        %v555 = vpop.f32.mrf.mxu0
        %v556 = vadd.f32 %v380, %v555
        %v557 = vpop.f32.mrf.mxu0
        %558 = vmatprep.mubr.bf16.mxu0 0
        %559 = vmatmul.mubr.bf16.gmra.mxu0 %v420
        %v560 = vpop.f32.mrf.mxu0
        %v561 = vadd.f32 %v380, %v560
        %v562 = vpop.f32.mrf.mxu0
        %v563 = vpop.f32.mrf.mxu0
        %v564 = vadd.f32 %v380, %v563
        %v565 = vpop.f32.mrf.mxu0
        %566 = vmatprep.mubr.bf16.mxu0 0
        %567 = vmatmul.mubr.bf16.gmra.mxu0 %v421
        %v568 = vpop.f32.mrf.mxu0
        %v569 = vadd.f32 %v380, %v568
        %v570 = vpop.f32.mrf.mxu0
        %v571 = vpop.f32.mrf.mxu0
        %v572 = vadd.f32 %v380, %v571
        %v573 = vpop.f32.mrf.mxu0
        %574 = vdwg.mxu0
        %v575 = vmax.f32 %v513, 0.0
        %v576 = vmax.f32 %v516, 0.0
        %v577 = vmax.f32 %v521, 0.0
        %v578 = vmax.f32 %v524, 0.0
        %v579 = vmax.f32 %v529, 0.0
        %v580 = vmax.f32 %v532, 0.0
        %v581 = vmax.f32 %v537, 0.0
        %v582 = vmax.f32 %v540, 0.0
        %v583 = vmax.f32 %v545, 0.0
        %v584 = vmax.f32 %v548, 0.0
        %v585 = vmax.f32 %v553, 0.0
        %v586 = vmax.f32 %v556, 0.0
        %v587 = vmax.f32 %v561, 0.0
        %v588 = vmax.f32 %v564, 0.0
        %v589 = vmax.f32 %v569, 0.0
        %v590 = vmax.f32 %v572, 0.0
        %v591 = vpack.c.bf16 %v576, %v575
        %v592 = vpack.c.bf16 %v578, %v577
        %v593 = vpack.c.bf16 %v580, %v579
        %v594 = vpack.c.bf16 %v582, %v581
        %v595 = vpack.c.bf16 %v584, %v583
        %v596 = vpack.c.bf16 %v586, %v585
        %v597 = vpack.c.bf16 %v588, %v587
        %v598 = vpack.c.bf16 %v590, %v589
        %v599 = vld [vmem:[#allocation7] sm:$0xf]
        %v600 = vld [vmem:[#allocation7 + $0x4] sm:$0xf]
        %v601 = vld [vmem:[#allocation7 + $0x8] sm:$0xf]
        %v602 = vld [vmem:[#allocation7 + $0xc] sm:$0xf]
        %v603 = vld [vmem:[#allocation7 + $0x10] sm:$0xf]
        %v604 = vld [vmem:[#allocation7 + $0x14] sm:$0xf]
        %v605 = vld [vmem:[#allocation7 + $0x18] sm:$0xf]
        %v606 = vld [vmem:[#allocation7 + $0x1c] sm:$0xf]
        %v607 = vld [vmem:[#allocation7 + $0x20] sm:$0xf]
        %v608 = vld [vmem:[#allocation7 + $0x24] sm:$0xf]
        %v609 = vld [vmem:[#allocation7 + $0x28] sm:$0xf]
        %v610 = vld [vmem:[#allocation7 + $0x2c] sm:$0xf]
        %v611 = vld [vmem:[#allocation7 + $0x30] sm:$0xf]
        %v612 = vld [vmem:[#allocation7 + $0x34] sm:$0xf]
        %v613 = vld [vmem:[#allocation7 + $0x38] sm:$0xf]
        %v614 = vld [vmem:[#allocation7 + $0x3c] sm:$0xf]
        %v615 = vld [vmem:[%s4] sm:$0x1]
        %v617 = vlaneseq
        %v618 = vshrl.u32 %v617, 7
        %v619 = vsub.s32 0, %v618
        %v620 = vrot.slane %v615, %v619
        %v638 = vunpack.c.l.b16 %v599
        %v639 = vunpack.c.l.b16 %v600
        %v640 = vunpack.c.l.b16 %v601
        %v641 = vunpack.c.l.b16 %v602
        %v642 = vunpack.c.l.b16 %v603
        %v643 = vunpack.c.l.b16 %v604
        %v644 = vunpack.c.l.b16 %v605
        %v645 = vunpack.c.l.b16 %v606
        %v646 = vunpack.c.l.b16 %v607
        %v647 = vunpack.c.l.b16 %v608
        %v648 = vunpack.c.l.b16 %v609
        %v649 = vunpack.c.l.b16 %v610
        %v650 = vunpack.c.l.b16 %v611
        %v651 = vunpack.c.l.b16 %v612
        %v652 = vunpack.c.l.b16 %v613
        %v653 = vunpack.c.l.b16 %v614
        %v654 = vpack.c.b16 %v639, %v638
        %v655 = vpack.c.b16 %v641, %v640
        %v656 = vpack.c.b16 %v643, %v642
        %v657 = vpack.c.b16 %v645, %v644
        %v658 = vpack.c.b16 %v647, %v646
        %v659 = vpack.c.b16 %v649, %v648
        %v660 = vpack.c.b16 %v651, %v650
        %v661 = vpack.c.b16 %v653, %v652
        %670 = vmatprep.subr.bf16.mxu0 0
        %671 = vmatpush1.bf16.msra.mxu0 %v661
        %672 = vmatprep.subr.bf16.mxu0 0
        %673 = vmatpush1.bf16.msra.mxu0 %v660
        %674 = vmatprep.subr.bf16.mxu0 0
        %675 = vmatpush1.bf16.msra.mxu0 %v659
        %676 = vmatprep.subr.bf16.mxu0 0
        %677 = vmatpush1.bf16.msra.mxu0 %v658
        %678 = vmatprep.subr.bf16.mxu0 0
        %679 = vmatpush1.bf16.msra.mxu0 %v657
        %680 = vmatprep.subr.bf16.mxu0 0
        %681 = vmatpush1.bf16.msra.mxu0 %v656
        %682 = vmatprep.subr.bf16.mxu0 0
        %683 = vmatpush1.bf16.msra.mxu0 %v655
        %684 = vmatprep.subr.bf16.mxu0 0
        %685 = vmatpush1.bf16.msra.mxu0 %v654
        %686 = vmatprep.subr.bf16.mxu0 0
        %687 = vmatpush2.bf16.msra.mxu0 0
        %688 = vmatprep.subr.bf16.mxu0 0
        %689 = vmatpush2.bf16.msra.mxu0 0
        %690 = vmatprep.subr.bf16.mxu0 0
        %691 = vmatpush2.bf16.msra.mxu0 0
        %692 = vmatprep.subr.bf16.mxu0 0
        %693 = vmatpush2.bf16.msra.mxu0 0
        %694 = vmatprep.subr.bf16.mxu0 0
        %695 = vmatpush2.bf16.msra.mxu0 0
        %696 = vmatprep.subr.bf16.mxu0 0
        %697 = vmatpush2.bf16.msra.mxu0 0
        %698 = vmatprep.subr.bf16.mxu0 0
        %699 = vmatpush2.bf16.msra.mxu0 0
        %700 = vmatprep.subr.bf16.mxu0 0
        %701 = vmatpush2.bf16.msra.mxu0 0
        %702 = vmatprep.mubr.bf16.mxu0 0
        %703 = vmatmul.mubr.bf16.gmra.mxu0 %v591
        %v704 = vpop.f32.mrf.mxu0
        %v705 = vadd.f32 %v620, %v704
        %v706 = vpop.f32.mrf.mxu0
        %v707 = vpop.f32.mrf.mxu0
        %v708 = vadd.f32 %v620, %v707
        %v709 = vpop.f32.mrf.mxu0
        %710 = vmatprep.mubr.bf16.mxu0 0
        %711 = vmatmul.mubr.bf16.gmra.mxu0 %v592
        %v712 = vpop.f32.mrf.mxu0
        %v713 = vadd.f32 %v620, %v712
        %v714 = vpop.f32.mrf.mxu0
        %v715 = vpop.f32.mrf.mxu0
        %v716 = vadd.f32 %v620, %v715
        %v717 = vpop.f32.mrf.mxu0
        %718 = vmatprep.mubr.bf16.mxu0 0
        %719 = vmatmul.mubr.bf16.gmra.mxu0 %v593
        %v720 = vpop.f32.mrf.mxu0
        %v721 = vadd.f32 %v620, %v720
        %v722 = vpop.f32.mrf.mxu0
        %v723 = vpop.f32.mrf.mxu0
        %v724 = vadd.f32 %v620, %v723
        %v725 = vpop.f32.mrf.mxu0
        %726 = vmatprep.mubr.bf16.mxu0 0
        %727 = vmatmul.mubr.bf16.gmra.mxu0 %v594
        %v728 = vpop.f32.mrf.mxu0
        %v729 = vadd.f32 %v620, %v728
        %v730 = vpop.f32.mrf.mxu0
        %v731 = vpop.f32.mrf.mxu0
        %v732 = vadd.f32 %v620, %v731
        %v733 = vpop.f32.mrf.mxu0
        %734 = vmatprep.mubr.bf16.mxu0 0
        %735 = vmatmul.mubr.bf16.gmra.mxu0 %v595
        %v736 = vpop.f32.mrf.mxu0
        %v737 = vadd.f32 %v620, %v736
        %v738 = vpop.f32.mrf.mxu0
        %v739 = vpop.f32.mrf.mxu0
        %v740 = vadd.f32 %v620, %v739
        %v741 = vpop.f32.mrf.mxu0
        %742 = vmatprep.mubr.bf16.mxu0 0
        %743 = vmatmul.mubr.bf16.gmra.mxu0 %v596
        %v744 = vpop.f32.mrf.mxu0
        %v745 = vadd.f32 %v620, %v744
        %v746 = vpop.f32.mrf.mxu0
        %v747 = vpop.f32.mrf.mxu0
        %v748 = vadd.f32 %v620, %v747
        %v749 = vpop.f32.mrf.mxu0
        %750 = vmatprep.mubr.bf16.mxu0 0
        %751 = vmatmul.mubr.bf16.gmra.mxu0 %v597
        %v752 = vpop.f32.mrf.mxu0
        %v753 = vadd.f32 %v620, %v752
        %v754 = vpop.f32.mrf.mxu0
        %v755 = vpop.f32.mrf.mxu0
        %v756 = vadd.f32 %v620, %v755
        %v757 = vpop.f32.mrf.mxu0
        %758 = vmatprep.mubr.bf16.mxu0 0
        %759 = vmatmul.mubr.bf16.gmra.mxu0 %v598
        %v760 = vpop.f32.mrf.mxu0
        %v761 = vadd.f32 %v620, %v760
        %v762 = vpop.f32.mrf.mxu0
        %v763 = vpop.f32.mrf.mxu0
        %v764 = vadd.f32 %v620, %v763
        %v765 = vpop.f32.mrf.mxu0
        %766 = vdwg.mxu0
        %v767 = vmax.f32 %v705, 0.0
        %v768 = vmax.f32 %v708, 0.0
        %v769 = vmax.f32 %v713, 0.0
        %v770 = vmax.f32 %v716, 0.0
        %v771 = vmax.f32 %v721, 0.0
        %v772 = vmax.f32 %v724, 0.0
        %v773 = vmax.f32 %v729, 0.0
        %v774 = vmax.f32 %v732, 0.0
        %v775 = vmax.f32 %v737, 0.0
        %v776 = vmax.f32 %v740, 0.0
        %v777 = vmax.f32 %v745, 0.0
        %v778 = vmax.f32 %v748, 0.0
        %v779 = vmax.f32 %v753, 0.0
        %v780 = vmax.f32 %v756, 0.0
        %v781 = vmax.f32 %v761, 0.0
        %v782 = vmax.f32 %v764, 0.0
        %v783 = vpack.c.bf16 %v768, %v767
        %v784 = vpack.c.bf16 %v770, %v769
        %v785 = vpack.c.bf16 %v772, %v771
        %v786 = vpack.c.bf16 %v774, %v773
        %v787 = vpack.c.bf16 %v776, %v775
        %v788 = vpack.c.bf16 %v778, %v777
        %v789 = vpack.c.bf16 %v780, %v779
        %v790 = vpack.c.bf16 %v782, %v781
        %v791 = vld [vmem:[#allocation8] sm:$0xf]
        %v792 = vld [vmem:[#allocation8 + $0x4] sm:$0xf]
        %v793 = vld [vmem:[#allocation8 + $0x8] sm:$0xf]
        %v794 = vld [vmem:[#allocation8 + $0xc] sm:$0xf]
        %v795 = vld [vmem:[#allocation8 + $0x10] sm:$0xf]
        %v796 = vld [vmem:[#allocation8 + $0x14] sm:$0xf]
        %v797 = vld [vmem:[#allocation8 + $0x18] sm:$0xf]
        %v798 = vld [vmem:[#allocation8 + $0x1c] sm:$0xf]
        %v799 = vld [vmem:[#allocation8 + $0x20] sm:$0xf]
        %v800 = vld [vmem:[#allocation8 + $0x24] sm:$0xf]
        %v801 = vld [vmem:[#allocation8 + $0x28] sm:$0xf]
        %v802 = vld [vmem:[#allocation8 + $0x2c] sm:$0xf]
        %v803 = vld [vmem:[#allocation8 + $0x30] sm:$0xf]
        %v804 = vld [vmem:[#allocation8 + $0x34] sm:$0xf]
        %v805 = vld [vmem:[#allocation8 + $0x38] sm:$0xf]
        %v806 = vld [vmem:[#allocation8 + $0x3c] sm:$0xf]
        %v807 = vld [vmem:[%s6] sm:$0x1]
        %v809 = vlaneseq
        %v810 = vshrl.u32 %v809, 7
        %v811 = vsub.s32 0, %v810
        %v812 = vrot.slane %v807, %v811
        %v830 = vunpack.c.l.b16 %v791
        %v831 = vunpack.c.l.b16 %v792
        %v832 = vunpack.c.l.b16 %v793
        %v833 = vunpack.c.l.b16 %v794
        %v834 = vunpack.c.l.b16 %v795
        %v835 = vunpack.c.l.b16 %v796
        %v836 = vunpack.c.l.b16 %v797
        %v837 = vunpack.c.l.b16 %v798
        %v838 = vunpack.c.l.b16 %v799
        %v839 = vunpack.c.l.b16 %v800
        %v840 = vunpack.c.l.b16 %v801
        %v841 = vunpack.c.l.b16 %v802
        %v842 = vunpack.c.l.b16 %v803
        %v843 = vunpack.c.l.b16 %v804
        %v844 = vunpack.c.l.b16 %v805
        %v845 = vunpack.c.l.b16 %v806
        %v846 = vpack.c.b16 %v831, %v830
        %v847 = vpack.c.b16 %v833, %v832
        %v848 = vpack.c.b16 %v835, %v834
        %v849 = vpack.c.b16 %v837, %v836
        %v850 = vpack.c.b16 %v839, %v838
        %v851 = vpack.c.b16 %v841, %v840
        %v852 = vpack.c.b16 %v843, %v842
        %v853 = vpack.c.b16 %v845, %v844
        %862 = vmatprep.subr.bf16.mxu0 0
        %863 = vmatpush1.bf16.msra.mxu0 %v853
        %864 = vmatprep.subr.bf16.mxu0 0
        %865 = vmatpush1.bf16.msra.mxu0 %v852
        %866 = vmatprep.subr.bf16.mxu0 0
        %867 = vmatpush1.bf16.msra.mxu0 %v851
        %868 = vmatprep.subr.bf16.mxu0 0
        %869 = vmatpush1.bf16.msra.mxu0 %v850
        %870 = vmatprep.subr.bf16.mxu0 0
        %871 = vmatpush1.bf16.msra.mxu0 %v849
        %872 = vmatprep.subr.bf16.mxu0 0
        %873 = vmatpush1.bf16.msra.mxu0 %v848
        %874 = vmatprep.subr.bf16.mxu0 0
        %875 = vmatpush1.bf16.msra.mxu0 %v847
        %876 = vmatprep.subr.bf16.mxu0 0
        %877 = vmatpush1.bf16.msra.mxu0 %v846
        %878 = vmatprep.subr.bf16.mxu0 0
        %879 = vmatpush2.bf16.msra.mxu0 0
        %880 = vmatprep.subr.bf16.mxu0 0
        %881 = vmatpush2.bf16.msra.mxu0 0
        %882 = vmatprep.subr.bf16.mxu0 0
        %883 = vmatpush2.bf16.msra.mxu0 0
        %884 = vmatprep.subr.bf16.mxu0 0
        %885 = vmatpush2.bf16.msra.mxu0 0
        %886 = vmatprep.subr.bf16.mxu0 0
        %887 = vmatpush2.bf16.msra.mxu0 0
        %888 = vmatprep.subr.bf16.mxu0 0
        %889 = vmatpush2.bf16.msra.mxu0 0
        %890 = vmatprep.subr.bf16.mxu0 0
        %891 = vmatpush2.bf16.msra.mxu0 0
        %892 = vmatprep.subr.bf16.mxu0 0
        %893 = vmatpush2.bf16.msra.mxu0 0
        %894 = vmatprep.mubr.bf16.mxu0 0
        %895 = vmatmul.mubr.bf16.gmra.mxu0 %v783
        %v896 = vpop.f32.mrf.mxu0
        %v897 = vadd.f32 %v812, %v896
        %v898 = vpop.f32.mrf.mxu0
        %v899 = vpop.f32.mrf.mxu0
        %v900 = vadd.f32 %v812, %v899
        %v901 = vpop.f32.mrf.mxu0
        %902 = vmatprep.mubr.bf16.mxu0 0
        %903 = vmatmul.mubr.bf16.gmra.mxu0 %v784
        %v904 = vpop.f32.mrf.mxu0
        %v905 = vadd.f32 %v812, %v904
        %v906 = vpop.f32.mrf.mxu0
        %v907 = vpop.f32.mrf.mxu0
        %v908 = vadd.f32 %v812, %v907
        %v909 = vpop.f32.mrf.mxu0
        %910 = vmatprep.mubr.bf16.mxu0 0
        %911 = vmatmul.mubr.bf16.gmra.mxu0 %v785
        %v912 = vpop.f32.mrf.mxu0
        %v913 = vadd.f32 %v812, %v912
        %v914 = vpop.f32.mrf.mxu0
        %v915 = vpop.f32.mrf.mxu0
        %v916 = vadd.f32 %v812, %v915
        %v917 = vpop.f32.mrf.mxu0
        %918 = vmatprep.mubr.bf16.mxu0 0
        %919 = vmatmul.mubr.bf16.gmra.mxu0 %v786
        %v920 = vpop.f32.mrf.mxu0
        %v921 = vadd.f32 %v812, %v920
        %v922 = vpop.f32.mrf.mxu0
        %v923 = vpop.f32.mrf.mxu0
        %v924 = vadd.f32 %v812, %v923
        %v925 = vpop.f32.mrf.mxu0
        %926 = vmatprep.mubr.bf16.mxu0 0
        %927 = vmatmul.mubr.bf16.gmra.mxu0 %v787
        %v928 = vpop.f32.mrf.mxu0
        %v929 = vadd.f32 %v812, %v928
        %v930 = vpop.f32.mrf.mxu0
        %v931 = vpop.f32.mrf.mxu0
        %v932 = vadd.f32 %v812, %v931
        %v933 = vpop.f32.mrf.mxu0
        %934 = vmatprep.mubr.bf16.mxu0 0
        %935 = vmatmul.mubr.bf16.gmra.mxu0 %v788
        %v936 = vpop.f32.mrf.mxu0
        %v937 = vadd.f32 %v812, %v936
        %v938 = vpop.f32.mrf.mxu0
        %v939 = vpop.f32.mrf.mxu0
        %v940 = vadd.f32 %v812, %v939
        %v941 = vpop.f32.mrf.mxu0
        %942 = vmatprep.mubr.bf16.mxu0 0
        %943 = vmatmul.mubr.bf16.gmra.mxu0 %v789
        %v944 = vpop.f32.mrf.mxu0
        %v945 = vadd.f32 %v812, %v944
        %v946 = vpop.f32.mrf.mxu0
        %v947 = vpop.f32.mrf.mxu0
        %v948 = vadd.f32 %v812, %v947
        %v949 = vpop.f32.mrf.mxu0
        %950 = vmatprep.mubr.bf16.mxu0 0
        %951 = vmatmul.mubr.bf16.gmra.mxu0 %v790
        %v952 = vpop.f32.mrf.mxu0
        %v953 = vadd.f32 %v812, %v952
        %v954 = vpop.f32.mrf.mxu0
        %v955 = vpop.f32.mrf.mxu0
        %v956 = vadd.f32 %v812, %v955
        %v957 = vpop.f32.mrf.mxu0
        %958 = vdwg.mxu0
        %v959 = vmax.f32 %v897, 0.0
        %v960 = vmax.f32 %v900, 0.0
        %v961 = vmax.f32 %v905, 0.0
        %v962 = vmax.f32 %v908, 0.0
        %v963 = vmax.f32 %v913, 0.0
        %v964 = vmax.f32 %v916, 0.0
        %v965 = vmax.f32 %v921, 0.0
        %v966 = vmax.f32 %v924, 0.0
        %v967 = vmax.f32 %v929, 0.0
        %v968 = vmax.f32 %v932, 0.0
        %v969 = vmax.f32 %v937, 0.0
        %v970 = vmax.f32 %v940, 0.0
        %v971 = vmax.f32 %v945, 0.0
        %v972 = vmax.f32 %v948, 0.0
        %v973 = vmax.f32 %v953, 0.0
        %v974 = vmax.f32 %v956, 0.0
        %v975 = vmax.f32 %v959, %v960
        %v976 = vrot.slane %v975, 4
        %v977 = vmax.f32 %v975, %v976
        %v978 = vrot.slane %v977, 2
        %v979 = vmax.f32 %v977, %v978
        %v980 = vrot.slane %v979, 1
        %v981 = vmax.f32 %v979, %v980
        %v982 = vmax.f32 %v961, %v962
        %v983 = vrot.slane %v982, 4
        %v984 = vmax.f32 %v982, %v983
        %v985 = vrot.slane %v984, 2
        %v986 = vmax.f32 %v984, %v985
        %v987 = vrot.slane %v986, 1
        %v988 = vmax.f32 %v986, %v987
        %v989 = vmax.f32 %v963, %v964
        %v990 = vrot.slane %v989, 4
        %v991 = vmax.f32 %v989, %v990
        %v992 = vrot.slane %v991, 2
        %v993 = vmax.f32 %v991, %v992
        %v994 = vrot.slane %v993, 1
        %v995 = vmax.f32 %v993, %v994
        %v996 = vmax.f32 %v965, %v966
        %v997 = vrot.slane %v996, 4
        %v998 = vmax.f32 %v996, %v997
        %v999 = vrot.slane %v998, 2
        %v1000 = vmax.f32 %v998, %v999
        %v1001 = vrot.slane %v1000, 1
        %v1002 = vmax.f32 %v1000, %v1001
        %v1003 = vmax.f32 %v967, %v968
        %v1004 = vrot.slane %v1003, 4
        %v1005 = vmax.f32 %v1003, %v1004
        %v1006 = vrot.slane %v1005, 2
        %v1007 = vmax.f32 %v1005, %v1006
        %v1008 = vrot.slane %v1007, 1
        %v1009 = vmax.f32 %v1007, %v1008
        %v1010 = vmax.f32 %v969, %v970
        %v1011 = vrot.slane %v1010, 4
        %v1012 = vmax.f32 %v1010, %v1011
        %v1013 = vrot.slane %v1012, 2
        %v1014 = vmax.f32 %v1012, %v1013
        %v1015 = vrot.slane %v1014, 1
        %v1016 = vmax.f32 %v1014, %v1015
        %v1017 = vmax.f32 %v971, %v972
        %v1018 = vrot.slane %v1017, 4
        %v1019 = vmax.f32 %v1017, %v1018
        %v1020 = vrot.slane %v1019, 2
        %v1021 = vmax.f32 %v1019, %v1020
        %v1022 = vrot.slane %v1021, 1
        %v1023 = vmax.f32 %v1021, %v1022
        %v1024 = vmax.f32 %v973, %v974
        %v1025 = vrot.slane %v1024, 4
        %v1026 = vmax.f32 %v1024, %v1025
        %v1027 = vrot.slane %v1026, 2
        %v1028 = vmax.f32 %v1026, %v1027
        %v1029 = vrot.slane %v1028, 1
        %v1030 = vmax.f32 %v1028, %v1029
        %vm1039 = vcmask 1041409
        %v1040 = vsel %vm1039, %v988, %v981
        %vm1041 = vcmask 1042434
        %v1042 = vsel %vm1041, %v995, %v1040
        %vm1043 = vcmask 1043459
        %v1044 = vsel %vm1043, %v1002, %v1042
        %vm1045 = vcmask 1044484
        %v1046 = vsel %vm1045, %v1009, %v1044
        %vm1047 = vcmask 1045509
        %v1048 = vsel %vm1047, %v1016, %v1046
        %vm1049 = vcmask 1046534
        %v1050 = vsel %vm1049, %v1023, %v1048
        %vm1051 = vcmask 1047559
        %v1052 = vsel %vm1051, %v1030, %v1050
        %1054 = vst [vmem:[%s340] sm:$0xff] %v1052
        %s1055 = sand.u32 %s186, 1
        %s1056 = scalar_lea.sflag [#allocation4], %s1055
        %s1057 = sand.u32 %s186, 1
        %s1058 = smul.addr %s1057, 8
        %s1059 = scalar_lea.vmem [#allocation10], %s1058
        // Predicated region
        $region65: #{tpu_custom_call.1} parent=47 // pred_check
          %p1060 = pneg %p196
        $region66: #{tpu_custom_call.1} parent=47 // pred_check_branch
          %1062 = sbr.rel (%p1060) target = $region68
        $region67: #{tpu_custom_call.1} parent=47 // pred_region
          %s1064 = ssub.s32 128, 128
          %1065 = vsyncadd %s1056, %s1064
          %s1066 = smul.addr %s26, 128
          %s1067 = scalar_lea.hbm %s7, %s1066
          %s1069 = sshll.u32 %s1059, 4
          %s1070 = int_to_ptr.vmem [resolvable:$true] %s1069
          %1072 = dma.vmem_to_hbm [thread:$0]  %s1070, 128, %s1067, %s1056
        $region68: #{tpu_custom_call.1} parent=47 // pred_fallthru
          _
      $region48: #{tpu_custom_call.1} parent=5 // pred_fallthru
        _
      %p1073 = scmp.le.s32.totalorder 2, %s21
      // Predicated region
      $region69: #{tpu_custom_call.1} parent=5 // pred_check
        %p1074 = pneg %p1073
      $region70: #{tpu_custom_call.1} parent=5 // pred_check_branch
        %1076 = sbr.rel (%p1074) target = $region72
      $region71: #{tpu_custom_call.1} parent=5 // pred_region
        %s1077 = ssub.s32 %s21, 2
        // Predicated region
        $region73: #{tpu_custom_call.1} parent=71 // pred_check
          %p1078 = pneg %p202
        $region74: #{tpu_custom_call.1} parent=71 // pred_check_branch
          %1080 = sbr.rel (%p1078) target = $region76
        $region75: #{tpu_custom_call.1} parent=71 // pred_region
          %s1081 = sand.u32 %s187, 1
          %s1082 = scalar_lea.sflag [#allocation4], %s1081
          %s1083 = sand.u32 %s187, 1
          %s1084 = smul.addr %s1083, 8
          %s1085 = scalar_lea.vmem [#allocation10], %s1084
          %1086 = dma.done %s1082, 128
        $region76: #{tpu_custom_call.1} parent=71 // pred_fallthru
          _
      $region72: #{tpu_custom_call.1} parent=5 // pred_fallthru
        _
    $region6: #{tpu_custom_call.1} parent=1 // loop_footer
      %s25 = sadd.s32 1, %s21
    $region7: #{tpu_custom_call.1} parent=1 // loop_footer_branch
      %20 = sbr.rel target = $region3
    $region8: #{tpu_custom_call.1} parent=1 // loop_exit
      _
    %1087 = vsyncpa [#allocation3], 1
    %s1088 = scalar_lea.sflag [#allocation3], 1
    %1089 = vsyncpa %s1088, 1
    %1090 = vsyncpa [#allocation6], 1
    %1091 = vsyncpa [#allocation9], 1
    %1092 = vsyncpa [#allocation4], 1
    %s1093 = scalar_lea.sflag [#allocation4], 1
    %1094 = vsyncpa %s1093, 1

</llo_original>
